<compile_context>
chip_gen: v7x
topology: tpu7x:2x2x1
jax: 0.10.0
libtpu: 0.0.40
codegen_flags: <defaults>
</compile_context>

<pallas_src>
import functools

import jax
import jax.numpy as jnp
import numpy as np
from jax.experimental import pallas as pl
from jax.experimental.pallas import tpu as pltpu


def _round_up(n, m):
    return (n + m - 1) // m * m


def _choose_tile_t(t_pad, batch, max_tile=2048, min_steps=4):
    """Largest 128-multiple divisor of t_pad (<= max_tile) keeping >= min_steps grid steps."""
    n128 = t_pad // 128
    # All 128-multiple tile sizes that evenly divide the (128-padded) time axis,
    # largest first -> no ragged tiles, no padding beyond the 128 alignment.
    candidates = [d * 128 for d in range(n128, 0, -1) if n128 % d == 0]
    feasible = [c for c in candidates if c <= max_tile] or [candidates[-1]]
    for c in feasible:
        if batch * (t_pad // c) >= min_steps:
            return c
    # Not enough work to reach min_steps no matter what -> take the biggest tile
    # (fewest per-step overheads).
    return feasible[0]


def resblock_kernel(x_ref, w1_ref, w2_ref, t_ref, out_ref):
    """One (C, tile_t) tile: conv1(+bn1 scale) -> +shift -> relu -> conv2(+bn2 scale) -> +shift -> +residual."""
    x = x_ref[0]                                               # (C, tile_t), f32
    shifts = t_ref[...]                                        # (C, 2), f32
    # conv1 with BN1 scale pre-folded into the weights; bf16 MXU, f32 accumulate.
    h = jnp.dot(w1_ref[...], x.astype(jnp.bfloat16),
                preferred_element_type=jnp.float32)
    h = jnp.maximum(h + shifts[:, 0:1], 0.0)                   # BN1 shift + ReLU (VPU, f32)
    # conv2 with BN2 scale pre-folded.
    y = jnp.dot(w2_ref[...], h.astype(jnp.bfloat16),
                preferred_element_type=jnp.float32)
    y = y + shifts[:, 1:2] + x                                 # BN2 shift + residual (f32)
    out_ref[0] = y.astype(out_ref.dtype)


def _fold_bn(gamma, beta, mean, var, eps=1e-5):
    scale = gamma.astype(jnp.float32) / jnp.sqrt(var.astype(jnp.float32) + eps)
    shift = beta.astype(jnp.float32) - mean.astype(jnp.float32) * scale
    return scale, shift


@functools.partial(jax.jit, static_argnames=("max_tile_t", "out_dtype"))
def resblock_forward(x, params, max_tile_t=2048, out_dtype=None):
    """x: (B, C, T) in the PyTorch Conv1d NCL layout. Returns (B, C, T)."""
    B, C, T = x.shape
    out_dtype = x.dtype if out_dtype is None else out_dtype

    # Pad the time axis to a multiple of 128 only (lane alignment), not tile_t.
    T_pad = _round_up(T, 128)
    if T_pad != T:
        x = jnp.pad(x, ((0, 0), (0, 0), (0, T_pad - T)))
    tile_t = _choose_tile_t(T_pad, B, max_tile=max_tile_t, min_steps=4)

    # Fold BN scales into the conv weights in f32, then cast once to bf16.
    s1, t1 = _fold_bn(params["g1"], params["b1"], params["m1"], params["v1"])
    s2, t2 = _fold_bn(params["g2"], params["b2"], params["m2"], params["v2"])
    w1 = (s1[:, None] * params["w1"].astype(jnp.float32)).astype(jnp.bfloat16)
    w2 = (s2[:, None] * params["w2"].astype(jnp.float32)).astype(jnp.bfloat16)
    shifts = jnp.stack([t1, t2], axis=-1).astype(jnp.float32)  # (C, 2)

    grid = (B, T_pad // tile_t)
    xo_spec = pl.BlockSpec((1, C, tile_t), lambda b, t: (b, 0, t))
    w_spec = pl.BlockSpec((C, C), lambda b, t: (0, 0))
    t_spec = pl.BlockSpec((C, 2), lambda b, t: (0, 0))

    # VMEM budget with lane-padded block sizes (double-buffered), + Mosaic headroom.
    x_bytes = C * tile_t * 4
    o_bytes = C * tile_t * jnp.dtype(out_dtype).itemsize
    vmem_limit = (2 * x_bytes                    # x tile, double-buffered
                  + 2 * o_bytes                  # out tile, double-buffered
                  + 2 * 2 * C * C * 2            # w1, w2 (bf16), double-buffered
                  + 2 * C * 128 * 4              # (C,2) shifts lane-pad to (C,128)
                  + (2 << 20))                   # internal scratch headroom
    vmem_limit = int(min(max(vmem_limit, 4 << 20), 48 << 20))

    out = pl.pallas_call(
        resblock_kernel,
        out_shape=jax.ShapeDtypeStruct((B, C, T_pad), out_dtype),
        grid=grid,
        in_specs=[xo_spec, w_spec, w_spec, t_spec],
        out_specs=xo_spec,
        compiler_params=pltpu.CompilerParams(
            dimension_semantics=("parallel", "parallel"),
            vmem_limit_bytes=vmem_limit),
    )(x, w1, w2, shifts)
    return out[:, :, :T] if T_pad != T else out


def init_params(key, dims):
    """Deterministic synthetic weights matching PyTorch layer shapes."""
    ks = jax.random.split(key, 10)
    s = 1.0 / np.sqrt(dims)

    def u(k, shape, lo, hi):
        return jax.random.uniform(k, shape, jnp.float32, lo, hi)

    return dict(
        w1=u(ks[0], (dims, dims), -s, s),   # Conv1d(dims, dims, 1).weight[:, :, 0]
        w2=u(ks[1], (dims, dims), -s, s),
        g1=u(ks[2], (dims,), 0.8, 1.2),     # BatchNorm1d affine + running stats
        b1=u(ks[3], (dims,), -0.1, 0.1),
        m1=u(ks[4], (dims,), -0.1, 0.1),
        v1=u(ks[5], (dims,), 0.5, 1.5),
        g2=u(ks[6], (dims,), 0.8, 1.2),
        b2=u(ks[7], (dims,), -0.1, 0.1),
        m2=u(ks[8], (dims,), -0.1, 0.1),
        v2=u(ks[9], (dims,), 0.5, 1.5),
    )


def resblock_ref(x, p, eps=1e-5):
    """Pure-JAX f32 reference mirroring the PyTorch forward (eval-mode BN)."""
    def bn(h, gamma, beta, mean, var):
        inv = 1.0 / jnp.sqrt(var + eps)
        return ((h - mean[None, :, None]) * inv[None, :, None]
                * gamma[None, :, None] + beta[None, :, None])

    h = jnp.einsum("oc,bct->bot", p["w1"], x)
    h = jax.nn.relu(bn(h, p["g1"], p["b1"], p["m1"], p["v1"]))
    y = jnp.einsum("oc,bct->bot", p["w2"], h)
    y = bn(y, p["g2"], p["b2"], p["m2"], p["v2"])
    return y + x


if __name__ == "__main__":
    key = jax.random.PRNGKey(0)
    B, dims, T = 2, 128, 512        # WaveRNN ResBlock compute dims = 128
    k_param, k_x = jax.random.split(key)
    params = init_params(k_param, dims)
    x = jax.random.normal(k_x, (B, dims, T), jnp.float32)

    y = resblock_forward(x, params)
    y = jax.block_until_ready(y)

    y_ref = resblock_ref(x, params)
    assert y.shape == (B, dims, T)
    # bf16 MXU operands / bf16-folded weights vs f32 reference -> loose-ish tolerance.
    assert np.allclose(np.asarray(y), np.asarray(y_ref), atol=2e-2, rtol=2e-2), (
        float(np.max(np.abs(np.asarray(y) - np.asarray(y_ref)))))
    print("KERNEL_OK")
</pallas_src>

<mosaic_0001>
module attributes {stable_mosaic.version = 11 : i64} {
  func.func @resblock_kernel(%arg0: i32, %arg1: i32, %arg2: memref<1x128x256xf32, #tpu.memory_space<vmem>>, %arg3: memref<128x128xbf16, #tpu.memory_space<vmem>>, %arg4: memref<128x128xbf16, #tpu.memory_space<vmem>>, %arg5: memref<128x2xf32, #tpu.memory_space<vmem>>, %arg6: memref<1x128x256xf32, #tpu.memory_space<vmem>>) attributes {dimension_semantics = [#tpu.dimension_semantics<parallel>, #tpu.dimension_semantics<parallel>], iteration_bounds = array<i64: 2, 2>, scalar_prefetch = 0 : i64, scratch_operands = 0 : i64, tpu.core_type = #tpu.core_type<tc>, window_params = [{transform_indices = @transform_0, window_bounds = array<i64: 1, 128, 256>}, {pipeline_mode = #tpu.pipeline_mode<synchronous>, transform_indices = @transform_1, window_bounds = array<i64: 128, 128>}, {pipeline_mode = #tpu.pipeline_mode<synchronous>, transform_indices = @transform_2, window_bounds = array<i64: 128, 128>}, {pipeline_mode = #tpu.pipeline_mode<synchronous>, transform_indices = @transform_3, window_bounds = array<i64: 128, 2>}, {transform_indices = @transform_4, window_bounds = array<i64: 1, 128, 256>}]} {
    %c0 = arith.constant 0 : index
    %c0_0 = arith.constant 0 : index
    %c0_1 = arith.constant 0 : index
    %0 = vector.load %arg2[%c0, %c0_0, %c0_1] : memref<1x128x256xf32, #tpu.memory_space<vmem>>, vector<1x128x256xf32>
    %1 = vector.shape_cast %0 : vector<1x128x256xf32> to vector<128x256xf32>
    %c0_2 = arith.constant 0 : index
    %c0_3 = arith.constant 0 : index
    %2 = vector.load %arg5[%c0_2, %c0_3] : memref<128x2xf32, #tpu.memory_space<vmem>>, vector<128x2xf32>
    %c0_4 = arith.constant 0 : index
    %c0_5 = arith.constant 0 : index
    %3 = vector.load %arg3[%c0_4, %c0_5] : memref<128x128xbf16, #tpu.memory_space<vmem>>, vector<128x128xbf16>
    %4 = arith.truncf %1 : vector<128x256xf32> to vector<128x256xbf16>
    %cst = arith.constant dense<0.000000e+00> : vector<128x256xf32>
    %5 = tpu.matmul %3, %4, %cst {dimension_numbers = #tpu.dot_dimension_numbers<[1], [0], [0], [1], [0, 0, 1, 1], [], []>} : vector<128x128xbf16>, vector<128x256xbf16>, vector<128x256xf32> -> vector<128x256xf32>
    %6 = vector.extract_strided_slice %2 {offsets = [0, 0], sizes = [128, 1], strides = [1, 1]} : vector<128x2xf32> to vector<128x1xf32>
    %7 = vector.broadcast %6 : vector<128x1xf32> to vector<128x256xf32>
    %8 = arith.addf %5, %7 : vector<128x256xf32>
    %cst_6 = arith.constant 0.000000e+00 : f32
    %9 = vector.broadcast %cst_6 : f32 to vector<128x256xf32>
    %10 = arith.maximumf %8, %9 : vector<128x256xf32>
    %c0_7 = arith.constant 0 : index
    %c0_8 = arith.constant 0 : index
    %11 = vector.load %arg4[%c0_7, %c0_8] : memref<128x128xbf16, #tpu.memory_space<vmem>>, vector<128x128xbf16>
    %12 = arith.truncf %10 : vector<128x256xf32> to vector<128x256xbf16>
    %cst_9 = arith.constant dense<0.000000e+00> : vector<128x256xf32>
    %13 = tpu.matmul %11, %12, %cst_9 {dimension_numbers = #tpu.dot_dimension_numbers<[1], [0], [0], [1], [0, 0, 1, 1], [], []>} : vector<128x128xbf16>, vector<128x256xbf16>, vector<128x256xf32> -> vector<128x256xf32>
    %14 = vector.extract_strided_slice %2 {offsets = [0, 1], sizes = [128, 1], strides = [1, 1]} : vector<128x2xf32> to vector<128x1xf32>
    %15 = vector.broadcast %14 : vector<128x1xf32> to vector<128x256xf32>
    %16 = arith.addf %13, %15 : vector<128x256xf32>
    %17 = arith.addf %16, %1 : vector<128x256xf32>
    %c0_10 = arith.constant 0 : index
    %c0_11 = arith.constant 0 : index
    %c0_12 = arith.constant 0 : index
    %18 = vector.load %arg6[%c0_10, %c0_11, %c0_12] : memref<1x128x256xf32, #tpu.memory_space<vmem>>, vector<1x128x256xf32>
    %19 = vector.shape_cast %18 : vector<1x128x256xf32> to vector<128x256xf32>
    %20 = vector.shape_cast %17 : vector<128x256xf32> to vector<1x128x256xf32>
    tpu.vector_store %arg6[%c0_10, %c0_11, %c0_12], %20 {strides = array<i32>} : memref<1x128x256xf32, #tpu.memory_space<vmem>>, vector<1x128x256xf32>,
    return
  }
  func.func @transform_0(%arg0: i32, %arg1: i32) -> (i32, i32, i32) {
    %c0_i32 = arith.constant 0 : i32
    %c0_i32_0 = arith.constant 0 : i32
    return %arg0, %c0_i32, %arg1 : i32, i32, i32
  }
  func.func @transform_1(%arg0: i32, %arg1: i32) -> (i32, i32) {
    %c0_i32 = arith.constant 0 : i32
    %c0_i32_0 = arith.constant 0 : i32
    %c0_i32_1 = arith.constant 0 : i32
    return %c0_i32, %c0_i32_0 : i32, i32
  }
  func.func @transform_2(%arg0: i32, %arg1: i32) -> (i32, i32) {
    %c0_i32 = arith.constant 0 : i32
    %c0_i32_0 = arith.constant 0 : i32
    %c0_i32_1 = arith.constant 0 : i32
    return %c0_i32, %c0_i32_0 : i32, i32
  }
  func.func @transform_3(%arg0: i32, %arg1: i32) -> (i32, i32) {
    %c0_i32 = arith.constant 0 : i32
    %c0_i32_0 = arith.constant 0 : i32
    %c0_i32_1 = arith.constant 0 : i32
    return %c0_i32, %c0_i32_0 : i32, i32
  }
  func.func @transform_4(%arg0: i32, %arg1: i32) -> (i32, i32, i32) {
    %c0_i32 = arith.constant 0 : i32
    %c0_i32_0 = arith.constant 0 : i32
    return %arg0, %c0_i32, %arg1 : i32, i32, i32
  }
}

</mosaic_0001>

<llo_original>
// kernel: resblock_forward.1
$region0: #{resblock_forward.1}
  #allocation0 [shape = 'u32[]', space=smem, size = 0x4, offset = 0x4, fixed_abs, tag = 'smem constant byte address 0x4 - core index']
  #allocation1 [shape = 'u32[144,128]{1,0:T(1,128)}', space=vmem, size = 0x12000, scoped, tag = 'internal scratch']
  %s0 = inlined_call_operand.hbm [shape: f32[2,128,512], index: 0, kind: input, shape index: {}]
  %s1 = inlined_call_operand.vmem [shape: bf16[128,128], index: 1, kind: input, shape index: {}]
  %s2 = inlined_call_operand.vmem [shape: bf16[128,128], index: 2, kind: input, shape index: {}]
  %s3 = inlined_call_operand.vmem [shape: f32[128,2], index: 3, kind: input, shape index: {}]
  %s4 = inlined_call_operand.hbm [shape: f32[2,128,512], index: 4, kind: output, shape index: {}]
  %s5 = sld [smem:[#allocation0]]
  $region53: #{resblock_forward.1} parent=0
    _
  %s7 = ssub.s32 1, %s5
  %s8 = scalar_select 0, %s7, %s5
  $region1: #{resblock_forward.1} parent=0
    #allocation2 [shape = 'u8[262144]{0}', space=vmem, size = 0x40000, scoped, tag = 'input window, operand 0']
    #allocation3 [shape = 's32[2]{0}', space=sflag, size = 0x8, scoped, tag = 'scoped memory for resblock_forward.1']
    #allocation4 [shape = 's32[2]{0}', space=sflag, size = 0x8, scoped, tag = 'scoped memory for resblock_forward.1']
    #allocation5 [shape = 'u8[262144]{0}', space=vmem, size = 0x40000, scoped, tag = 'output window, operand 0']
    %9 = vsyncpa [#allocation3], 0
    %s10 = scalar_lea.sflag [#allocation3], 1
    %11 = vsyncpa %s10, 0
    %12 = vsyncpa [#allocation4], 0
    %s13 = scalar_lea.sflag [#allocation4], 1
    %14 = vsyncpa %s13, 0
    loop: start=0, step=1, limit=6
    $region2: #{resblock_forward.1} parent=1 // loop_pre_header
      _
    $region3: #{resblock_forward.1} parent=1 // loop_header
      %s16 = sphi 0, %s20
      %p17 = scmp.ge.s32.totalorder %s16, 6
      %s23 = sphi 0, %s35
      %s24 = sphi 0, %s31
      %s25 = sphi 0, %s23
      %s26 = sphi 0, %s24
      %s27 = sphi 0, %s25
      %s28 = sphi 0, %s26
      %s40 = sphi 0, %s42
      %s43 = sphi 0, %s40
      %s44 = sphi 0, %s43
      %s60 = sphi 0, %s44
      %s64 = sphi 0, %s64
      %s66 = sphi 0, %s64
      %s67 = sphi 0, %s66
      %s81 = sphi 0, %s67
      %s85 = sphi 0, %s85
      %s87 = sphi 0, %s85
      %s88 = sphi 0, %s87
      %s102 = sphi 0, %s88
      %s106 = sphi 0, %s106
      %s108 = sphi 0, %s106
      %s109 = sphi 0, %s108
      %s123 = sphi 0, %s109
      %s131 = sphi 0, %s133
      %s134 = sphi 0, %s131
      %s135 = sphi 0, %s134
      %s151 = sphi 0, %s135
    $region4: #{resblock_forward.1} parent=1 // loop_header_branch
      %19 = sbr.rel (%p17) target = $region8
    $region5: #{resblock_forward.1} parent=1 // loop_body
      %s21 = ssub.s32 %s16, 1
      %s22 = ssub.s32 %s16, 2
      %s29 = sadd.s32 1, %s24
      %p30 = scmp.ge.s32.totalorder %s29, 2
      %s31 = scalar_select %p30, 0, %s29
      %s32 = sadd.s32 1, %s23
      %s33 = scalar_select %p30, %s32, %s23
      %p34 = scmp.ge.s32.totalorder %s33, 2
      %s35 = scalar_select %p34, 0, %s33
      %s36 = ssub.s32 %s23, %s35
      %s37 = ssub.s32 %s24, %s31
      %s38 = sor.u32 %s36, %s37
      %p39 = scmp.eq.s32.totalorder %s38, 0
      %s41 = sadd.s32 %s40, 1
      %s42 = scalar_select %p39, %s40, %s41
      %p45 = pneg %p39
      %p46 = scmp.eq.s32.totalorder %s16, 3
      %p47 = por %p45, %p46
      %p48 = scmp.ne.s32.totalorder %s40, %s43
      %p49 = scmp.eq.s32.totalorder %s16, 0
      %p50 = por %p48, %p49
      %p51 = scmp.ne.s32.totalorder %s40, %s43
      %p52 = scmp.eq.s32.totalorder %s21, 3
      %p53 = por %p51, %p52
      %p54 = scmp.ne.s32.totalorder %s43, %s44
      %p55 = scmp.eq.s32.totalorder %s21, 0
      %p56 = por %p54, %p55
      %p57 = scmp.ne.s32.totalorder %s43, %s44
      %p58 = scmp.eq.s32.totalorder %s22, 3
      %p59 = por %p57, %p58
      %p61 = scmp.ne.s32.totalorder %s44, %s60
      %p62 = scmp.eq.s32.totalorder %s22, 0
      %p63 = por %p61, %p62
      %s65 = sadd.s32 %s64, 1
      %p68 = scmp.eq.s32.totalorder %s16, 3
      %p69 = scmp.ne.s32.totalorder %s64, %s66
      %p70 = scmp.eq.s32.totalorder %s16, 0
      %p71 = por %p69, %p70
      %p72 = scmp.ne.s32.totalorder %s64, %s66
      %p73 = scmp.eq.s32.totalorder %s21, 3
      %p74 = por %p72, %p73
      %p75 = scmp.ne.s32.totalorder %s66, %s67
      %p76 = scmp.eq.s32.totalorder %s21, 0
      %p77 = por %p75, %p76
      %p78 = scmp.ne.s32.totalorder %s66, %s67
      %p79 = scmp.eq.s32.totalorder %s22, 3
      %p80 = por %p78, %p79
      %p82 = scmp.ne.s32.totalorder %s67, %s81
      %p83 = scmp.eq.s32.totalorder %s22, 0
      %p84 = por %p82, %p83
      %s86 = sadd.s32 %s85, 1
      %p89 = scmp.eq.s32.totalorder %s16, 3
      %p90 = scmp.ne.s32.totalorder %s85, %s87
      %p91 = scmp.eq.s32.totalorder %s16, 0
      %p92 = por %p90, %p91
      %p93 = scmp.ne.s32.totalorder %s85, %s87
      %p94 = scmp.eq.s32.totalorder %s21, 3
      %p95 = por %p93, %p94
      %p96 = scmp.ne.s32.totalorder %s87, %s88
      %p97 = scmp.eq.s32.totalorder %s21, 0
      %p98 = por %p96, %p97
      %p99 = scmp.ne.s32.totalorder %s87, %s88
      %p100 = scmp.eq.s32.totalorder %s22, 3
      %p101 = por %p99, %p100
      %p103 = scmp.ne.s32.totalorder %s88, %s102
      %p104 = scmp.eq.s32.totalorder %s22, 0
      %p105 = por %p103, %p104
      %s107 = sadd.s32 %s106, 1
      %p110 = scmp.eq.s32.totalorder %s16, 3
      %p111 = scmp.ne.s32.totalorder %s106, %s108
      %p112 = scmp.eq.s32.totalorder %s16, 0
      %p113 = por %p111, %p112
      %p114 = scmp.ne.s32.totalorder %s106, %s108
      %p115 = scmp.eq.s32.totalorder %s21, 3
      %p116 = por %p114, %p115
      %p117 = scmp.ne.s32.totalorder %s108, %s109
      %p118 = scmp.eq.s32.totalorder %s21, 0
      %p119 = por %p117, %p118
      %p120 = scmp.ne.s32.totalorder %s108, %s109
      %p121 = scmp.eq.s32.totalorder %s22, 3
      %p122 = por %p120, %p121
      %p124 = scmp.ne.s32.totalorder %s109, %s123
      %p125 = scmp.eq.s32.totalorder %s22, 0
      %p126 = por %p124, %p125
      %s127 = ssub.s32 %s23, %s35
      %s128 = ssub.s32 %s24, %s31
      %s129 = sor.u32 %s127, %s128
      %p130 = scmp.eq.s32.totalorder %s129, 0
      %s132 = sadd.s32 %s131, 1
      %s133 = scalar_select %p130, %s131, %s132
      %p136 = pneg %p130
      %p137 = scmp.eq.s32.totalorder %s16, 3
      %p138 = por %p136, %p137
      %p139 = scmp.ne.s32.totalorder %s131, %s134
      %p140 = scmp.eq.s32.totalorder %s16, 0
      %p141 = por %p139, %p140
      %p142 = scmp.ne.s32.totalorder %s131, %s134
      %p143 = scmp.eq.s32.totalorder %s21, 3
      %p144 = por %p142, %p143
      %p145 = scmp.ne.s32.totalorder %s134, %s135
      %p146 = scmp.eq.s32.totalorder %s21, 0
      %p147 = por %p145, %p146
      %p148 = scmp.ne.s32.totalorder %s134, %s135
      %p149 = scmp.eq.s32.totalorder %s22, 3
      %p150 = por %p148, %p149
      %p152 = scmp.ne.s32.totalorder %s135, %s151
      %p153 = scmp.eq.s32.totalorder %s22, 0
      %p154 = por %p152, %p153
      %p155 = scmp.le.s32.totalorder 1, %s16
      %p156 = scmp.lt.s32.totalorder %s16, 5
      %p157 = pnand %p155, %p156
      %p158 = pneg %p157
      // Predicated region
      $region9: #{resblock_forward.1} parent=5 // pred_check
        _
      $region10: #{resblock_forward.1} parent=5 // pred_check_branch
        %160 = sbr.rel (%p157) target = $region12
      $region11: #{resblock_forward.1} parent=5 // pred_region
        %s161 = ssub.s32 %s16, 1
        // Predicated region
        $region13: #{resblock_forward.1} parent=11 // pred_check
          %p162 = pneg %p77
        $region14: #{resblock_forward.1} parent=11 // pred_check_branch
          %164 = sbr.rel (%p162) target = $region16
        $region15: #{resblock_forward.1} parent=11 // pred_region
          _
        $region16: #{resblock_forward.1} parent=11 // pred_fallthru
          _
        // Predicated region
        $region17: #{resblock_forward.1} parent=11 // pred_check
          %p165 = pneg %p98
        $region18: #{resblock_forward.1} parent=11 // pred_check_branch
          %167 = sbr.rel (%p165) target = $region20
        $region19: #{resblock_forward.1} parent=11 // pred_region
          _
        $region20: #{resblock_forward.1} parent=11 // pred_fallthru
          _
        // Predicated region
        $region21: #{resblock_forward.1} parent=11 // pred_check
          %p168 = pneg %p119
        $region22: #{resblock_forward.1} parent=11 // pred_check_branch
          %170 = sbr.rel (%p168) target = $region24
        $region23: #{resblock_forward.1} parent=11 // pred_region
          _
        $region24: #{resblock_forward.1} parent=11 // pred_fallthru
          _
      $region12: #{resblock_forward.1} parent=5 // pred_fallthru
        _
      %p171 = scmp.lt.s32.totalorder %s16, 4
      // Predicated region
      $region25: #{resblock_forward.1} parent=5 // pred_check
        %p172 = pneg %p171
      $region26: #{resblock_forward.1} parent=5 // pred_check_branch
        %174 = sbr.rel (%p172) target = $region28
      $region27: #{resblock_forward.1} parent=5 // pred_region
        // Predicated region
        $region29: #{resblock_forward.1} parent=27 // pred_check
          %p175 = pneg %p50
        $region30: #{resblock_forward.1} parent=27 // pred_check_branch
          %177 = sbr.rel (%p175) target = $region32
        $region31: #{resblock_forward.1} parent=27 // pred_region
          %s178 = sand.u32 %s40, 1
          %s179 = scalar_lea.sflag [#allocation3], %s178
          %s180 = sand.u32 %s40, 1
          %s181 = smul.addr %s180, 256
          %s182 = scalar_lea.vmem [#allocation2], %s181
          %s183 = smul.u32 2, %s24
          %s185 = ssub.s32 4096, 4096
          %186 = vsyncadd %s179, %s185
          %s187 = smul.addr %s23, 64
          %s188 = sadd.s32 %s183, %s187
          %s189 = smul.addr %s188, 128
          %s190 = scalar_lea.hbm %s0, %s189
          %s191 = sshll.u32 %s182, 4
          %s192 = int_to_ptr.vmem [resolvable:$true] %s191
          %197 = dma.hbm_to_vmem [thread:$0]  %s190, 4096, %s192, %s179, 512, 256, 16
        $region32: #{resblock_forward.1} parent=27 // pred_fallthru
          _
      $region28: #{resblock_forward.1} parent=5 // pred_fallthru
        _
      %p198 = scmp.le.s32.totalorder 1, %s16
      %p199 = scmp.lt.s32.totalorder %s16, 5
      %p200 = pnand %p198, %p199
      %p201 = pneg %p200
      // Predicated region
      $region33: #{resblock_forward.1} parent=5 // pred_check
        _
      $region34: #{resblock_forward.1} parent=5 // pred_check_branch
        %203 = sbr.rel (%p200) target = $region36
      $region35: #{resblock_forward.1} parent=5 // pred_region
        %s204 = ssub.s32 %s16, 1
        %s205 = sand.u32 %s43, 1
        %s206 = scalar_lea.sflag [#allocation3], %s205
        %s207 = sand.u32 %s43, 1
        %s208 = smul.addr %s207, 256
        %s209 = scalar_lea.vmem [#allocation2], %s208
        // Predicated region
        $region37: #{resblock_forward.1} parent=35 // pred_check
          %p210 = pneg %p56
        $region38: #{resblock_forward.1} parent=35 // pred_check_branch
          %212 = sbr.rel (%p210) target = $region40
        $region39: #{resblock_forward.1} parent=35 // pred_region
          %213 = dma.done %s206, 4096
        $region40: #{resblock_forward.1} parent=35 // pred_fallthru
          _
        %s214 = sand.u32 %s43, 1
        %s215 = scalar_lea.sflag [#allocation3], %s214
        %s216 = sand.u32 %s43, 1
        %s217 = smul.addr %s216, 256
        %s218 = scalar_lea.vmem [#allocation2], %s217
        %p219 = pneg %p56
        %p220 = pneg %p53
        %p221 = pneg %p77
        %p222 = pneg %p74
        %p223 = pneg %p98
        %p224 = pneg %p95
        %p225 = pneg %p119
        %p226 = pneg %p116
        %p227 = pneg %p147
        %p228 = pneg %p144
        %s229 = sand.u32 %s134, 1
        %s230 = scalar_lea.sflag [#allocation4], %s229
        %s231 = sand.u32 %s134, 1
        %s232 = smul.addr %s231, 256
        %s233 = scalar_lea.vmem [#allocation5], %s232
        %s234 = smul.u32 2, %s26
        %s235 = smul.u32 2, %s26
        %v237 = vld [vmem:[%s209] sm:$0xff]
        %v238 = vld [vmem:[%s209 + $0x8] sm:$0xff]
        %v239 = vld [vmem:[%s209 + $0x10] sm:$0xff]
        %v240 = vld [vmem:[%s209 + $0x18] sm:$0xff]
        %v241 = vld [vmem:[%s209 + $0x20] sm:$0xff]
        %v242 = vld [vmem:[%s209 + $0x28] sm:$0xff]
        %v243 = vld [vmem:[%s209 + $0x30] sm:$0xff]
        %v244 = vld [vmem:[%s209 + $0x38] sm:$0xff]
        %v245 = vld [vmem:[%s209 + $0x40] sm:$0xff]
        %v246 = vld [vmem:[%s209 + $0x48] sm:$0xff]
        %v247 = vld [vmem:[%s209 + $0x50] sm:$0xff]
        %v248 = vld [vmem:[%s209 + $0x58] sm:$0xff]
        %v249 = vld [vmem:[%s209 + $0x60] sm:$0xff]
        %v250 = vld [vmem:[%s209 + $0x68] sm:$0xff]
        %v251 = vld [vmem:[%s209 + $0x70] sm:$0xff]
        %v252 = vld [vmem:[%s209 + $0x78] sm:$0xff]
        %v253 = vld [vmem:[%s209 + $0x80] sm:$0xff]
        %v254 = vld [vmem:[%s209 + $0x88] sm:$0xff]
        %v255 = vld [vmem:[%s209 + $0x90] sm:$0xff]
        %v256 = vld [vmem:[%s209 + $0x98] sm:$0xff]
        %v257 = vld [vmem:[%s209 + $0xa0] sm:$0xff]
        %v258 = vld [vmem:[%s209 + $0xa8] sm:$0xff]
        %v259 = vld [vmem:[%s209 + $0xb0] sm:$0xff]
        %v260 = vld [vmem:[%s209 + $0xb8] sm:$0xff]
        %v261 = vld [vmem:[%s209 + $0xc0] sm:$0xff]
        %v262 = vld [vmem:[%s209 + $0xc8] sm:$0xff]
        %v263 = vld [vmem:[%s209 + $0xd0] sm:$0xff]
        %v264 = vld [vmem:[%s209 + $0xd8] sm:$0xff]
        %v265 = vld [vmem:[%s209 + $0xe0] sm:$0xff]
        %v266 = vld [vmem:[%s209 + $0xe8] sm:$0xff]
        %v267 = vld [vmem:[%s209 + $0xf0] sm:$0xff]
        %v268 = vld [vmem:[%s209 + $0xf8] sm:$0xff]
        %v269 = vld [vmem:[%s3] sm:$0xff]
        %v270 = vld [vmem:[%s3 + $0x8] sm:$0xff]
        %v271 = vld [vmem:[%s3 + $0x10] sm:$0xff]
        %v272 = vld [vmem:[%s3 + $0x18] sm:$0xff]
        %v273 = vld [vmem:[%s3 + $0x20] sm:$0xff]
        %v274 = vld [vmem:[%s3 + $0x28] sm:$0xff]
        %v275 = vld [vmem:[%s3 + $0x30] sm:$0xff]
        %v276 = vld [vmem:[%s3 + $0x38] sm:$0xff]
        %v277 = vld [vmem:[%s3 + $0x40] sm:$0xff]
        %v278 = vld [vmem:[%s3 + $0x48] sm:$0xff]
        %v279 = vld [vmem:[%s3 + $0x50] sm:$0xff]
        %v280 = vld [vmem:[%s3 + $0x58] sm:$0xff]
        %v281 = vld [vmem:[%s3 + $0x60] sm:$0xff]
        %v282 = vld [vmem:[%s3 + $0x68] sm:$0xff]
        %v283 = vld [vmem:[%s3 + $0x70] sm:$0xff]
        %v284 = vld [vmem:[%s3 + $0x78] sm:$0xff]
        %v285 = vld [vmem:[%s1] sm:$0xf]
        %v286 = vld [vmem:[%s1 + $0x4] sm:$0xf]
        %v287 = vld [vmem:[%s1 + $0x8] sm:$0xf]
        %v288 = vld [vmem:[%s1 + $0xc] sm:$0xf]
        %v289 = vld [vmem:[%s1 + $0x10] sm:$0xf]
        %v290 = vld [vmem:[%s1 + $0x14] sm:$0xf]
        %v291 = vld [vmem:[%s1 + $0x18] sm:$0xf]
        %v292 = vld [vmem:[%s1 + $0x1c] sm:$0xf]
        %v293 = vld [vmem:[%s1 + $0x20] sm:$0xf]
        %v294 = vld [vmem:[%s1 + $0x24] sm:$0xf]
        %v295 = vld [vmem:[%s1 + $0x28] sm:$0xf]
        %v296 = vld [vmem:[%s1 + $0x2c] sm:$0xf]
        %v297 = vld [vmem:[%s1 + $0x30] sm:$0xf]
        %v298 = vld [vmem:[%s1 + $0x34] sm:$0xf]
        %v299 = vld [vmem:[%s1 + $0x38] sm:$0xf]
        %v300 = vld [vmem:[%s1 + $0x3c] sm:$0xf]
        %v301 = vpack.c.bf16 %v239, %v237
        %v302 = vpack.c.bf16 %v240, %v238
        %v303 = vpack.c.bf16 %v243, %v241
        %v304 = vpack.c.bf16 %v244, %v242
        %v305 = vpack.c.bf16 %v247, %v245
        %v306 = vpack.c.bf16 %v248, %v246
        %v307 = vpack.c.bf16 %v251, %v249
        %v308 = vpack.c.bf16 %v252, %v250
        %v309 = vpack.c.bf16 %v255, %v253
        %v310 = vpack.c.bf16 %v256, %v254
        %v311 = vpack.c.bf16 %v259, %v257
        %v312 = vpack.c.bf16 %v260, %v258
        %v313 = vpack.c.bf16 %v263, %v261
        %v314 = vpack.c.bf16 %v264, %v262
        %v315 = vpack.c.bf16 %v267, %v265
        %v316 = vpack.c.bf16 %v268, %v266
        %318 = vset.pattern.permute.xlu0 0
        %319 = vperm.xlu0 %318, %v269
        %v320 = vpop.permute.xlu0 %319
        %323 = vset.pattern.permute.xlu0 0
        %324 = vperm.xlu0 %323, %v270
        %v325 = vpop.permute.xlu0 %324
        %328 = vset.pattern.permute.xlu0 0
        %329 = vperm.xlu0 %328, %v271
        %v330 = vpop.permute.xlu0 %329
        %333 = vset.pattern.permute.xlu0 0
        %334 = vperm.xlu0 %333, %v272
        %v335 = vpop.permute.xlu0 %334
        %338 = vset.pattern.permute.xlu0 0
        %339 = vperm.xlu0 %338, %v273
        %v340 = vpop.permute.xlu0 %339
        %343 = vset.pattern.permute.xlu0 0
        %344 = vperm.xlu0 %343, %v274
        %v345 = vpop.permute.xlu0 %344
        %348 = vset.pattern.permute.xlu0 0
        %349 = vperm.xlu0 %348, %v275
        %v350 = vpop.permute.xlu0 %349
        %353 = vset.pattern.permute.xlu0 0
        %354 = vperm.xlu0 %353, %v276
        %v355 = vpop.permute.xlu0 %354
        %358 = vset.pattern.permute.xlu0 0
        %359 = vperm.xlu0 %358, %v277
        %v360 = vpop.permute.xlu0 %359
        %363 = vset.pattern.permute.xlu0 0
        %364 = vperm.xlu0 %363, %v278
        %v365 = vpop.permute.xlu0 %364
        %368 = vset.pattern.permute.xlu0 0
        %369 = vperm.xlu0 %368, %v279
        %v370 = vpop.permute.xlu0 %369
        %373 = vset.pattern.permute.xlu0 0
        %374 = vperm.xlu0 %373, %v280
        %v375 = vpop.permute.xlu0 %374
        %378 = vset.pattern.permute.xlu0 0
        %379 = vperm.xlu0 %378, %v281
        %v380 = vpop.permute.xlu0 %379
        %383 = vset.pattern.permute.xlu0 0
        %384 = vperm.xlu0 %383, %v282
        %v385 = vpop.permute.xlu0 %384
        %388 = vset.pattern.permute.xlu0 0
        %389 = vperm.xlu0 %388, %v283
        %v390 = vpop.permute.xlu0 %389
        %393 = vset.pattern.permute.xlu0 0
        %394 = vperm.xlu0 %393, %v284
        %v395 = vpop.permute.xlu0 %394
        %v413 = vunpack.c.l.b16 %v285
        %v414 = vunpack.c.l.b16 %v286
        %v415 = vunpack.c.l.b16 %v287
        %v416 = vunpack.c.l.b16 %v288
        %v417 = vunpack.c.l.b16 %v289
        %v418 = vunpack.c.l.b16 %v290
        %v419 = vunpack.c.l.b16 %v291
        %v420 = vunpack.c.l.b16 %v292
        %v421 = vunpack.c.l.b16 %v293
        %v422 = vunpack.c.l.b16 %v294
        %v423 = vunpack.c.l.b16 %v295
        %v424 = vunpack.c.l.b16 %v296
        %v425 = vunpack.c.l.b16 %v297
        %v426 = vunpack.c.l.b16 %v298
        %v427 = vunpack.c.l.b16 %v299
        %v428 = vunpack.c.l.b16 %v300
        %v429 = vpack.c.b16 %v414, %v413
        %v430 = vpack.c.b16 %v416, %v415
        %v431 = vpack.c.b16 %v418, %v417
        %v432 = vpack.c.b16 %v420, %v419
        %v433 = vpack.c.b16 %v422, %v421
        %v434 = vpack.c.b16 %v424, %v423
        %v435 = vpack.c.b16 %v426, %v425
        %v436 = vpack.c.b16 %v428, %v427
        %445 = vmatprep.subr.bf16.mxu0 %v302
        %446 = vmatpush1.bf16.msra.mxu0 %v301
        %447 = vmatprep.subr.bf16.mxu0 %v304
        %448 = vmatpush1.bf16.msra.mxu0 %v303
        %449 = vmatprep.subr.bf16.mxu0 %v306
        %450 = vmatpush1.bf16.msra.mxu0 %v305
        %451 = vmatprep.subr.bf16.mxu0 %v308
        %452 = vmatpush1.bf16.msra.mxu0 %v307
        %453 = vmatprep.subr.bf16.mxu0 %v310
        %454 = vmatpush1.bf16.msra.mxu0 %v309
        %455 = vmatprep.subr.bf16.mxu0 %v312
        %456 = vmatpush1.bf16.msra.mxu0 %v311
        %457 = vmatprep.subr.bf16.mxu0 %v314
        %458 = vmatpush1.bf16.msra.mxu0 %v313
        %459 = vmatprep.subr.bf16.mxu0 %v316
        %460 = vmatpush1.bf16.msra.mxu0 %v315
        %461 = vmatprep.subr.bf16.mxu0 0
        %462 = vmatpush1.bf16.msra.mxu0 0
        %463 = vmatprep.subr.bf16.mxu0 0
        %464 = vmatpush1.bf16.msra.mxu0 0
        %465 = vmatprep.subr.bf16.mxu0 0
        %466 = vmatpush1.bf16.msra.mxu0 0
        %467 = vmatprep.subr.bf16.mxu0 0
        %468 = vmatpush1.bf16.msra.mxu0 0
        %469 = vmatprep.subr.bf16.mxu0 0
        %470 = vmatpush1.bf16.msra.mxu0 0
        %471 = vmatprep.subr.bf16.mxu0 0
        %472 = vmatpush1.bf16.msra.mxu0 0
        %473 = vmatprep.subr.bf16.mxu0 0
        %474 = vmatpush1.bf16.msra.mxu0 0
        %475 = vmatprep.subr.bf16.mxu0 0
        %476 = vmatpush1.bf16.msra.mxu0 0
        %477 = vmatprep.mubr.bf16.mxu0 0
        %478 = vmatmul.mubr.bf16.gmra.mrb[0].mxu0 %v429
        %v479 = vpop.f32.mrb[0].mxu0
        %v480 = vadd.f32 %v320, %v479
        %v481 = vpop.f32.mrb[0].mxu0
        %v482 = vadd.f32 %v320, %v481
        %v483 = vpop.f32.mrb[0].mxu0
        %v484 = vadd.f32 %v325, %v483
        %v485 = vpop.f32.mrb[0].mxu0
        %v486 = vadd.f32 %v325, %v485
        %487 = vmatprep.mubr.bf16.mxu0 0
        %488 = vmatmul.mubr.bf16.gmra.mrb[0].mxu0 %v430
        %v489 = vpop.f32.mrb[0].mxu0
        %v490 = vadd.f32 %v330, %v489
        %v491 = vpop.f32.mrb[0].mxu0
        %v492 = vadd.f32 %v330, %v491
        %v493 = vpop.f32.mrb[0].mxu0
        %v494 = vadd.f32 %v335, %v493
        %v495 = vpop.f32.mrb[0].mxu0
        %v496 = vadd.f32 %v335, %v495
        %497 = vmatprep.mubr.bf16.mxu0 0
        %498 = vmatmul.mubr.bf16.gmra.mrb[0].mxu0 %v431
        %v499 = vpop.f32.mrb[0].mxu0
        %v500 = vadd.f32 %v340, %v499
        %v501 = vpop.f32.mrb[0].mxu0
        %v502 = vadd.f32 %v340, %v501
        %v503 = vpop.f32.mrb[0].mxu0
        %v504 = vadd.f32 %v345, %v503
        %v505 = vpop.f32.mrb[0].mxu0
        %v506 = vadd.f32 %v345, %v505
        %507 = vmatprep.mubr.bf16.mxu0 0
        %508 = vmatmul.mubr.bf16.gmra.mrb[0].mxu0 %v432
        %v509 = vpop.f32.mrb[0].mxu0
        %v510 = vadd.f32 %v350, %v509
        %v511 = vpop.f32.mrb[0].mxu0
        %v512 = vadd.f32 %v350, %v511
        %v513 = vpop.f32.mrb[0].mxu0
        %v514 = vadd.f32 %v355, %v513
        %v515 = vpop.f32.mrb[0].mxu0
        %v516 = vadd.f32 %v355, %v515
        %517 = vmatprep.mubr.bf16.mxu0 0
        %518 = vmatmul.mubr.bf16.gmra.mrb[0].mxu0 %v433
        %v519 = vpop.f32.mrb[0].mxu0
        %v520 = vadd.f32 %v360, %v519
        %v521 = vpop.f32.mrb[0].mxu0
        %v522 = vadd.f32 %v360, %v521
        %v523 = vpop.f32.mrb[0].mxu0
        %v524 = vadd.f32 %v365, %v523
        %v525 = vpop.f32.mrb[0].mxu0
        %v526 = vadd.f32 %v365, %v525
        %527 = vmatprep.mubr.bf16.mxu0 0
        %528 = vmatmul.mubr.bf16.gmra.mrb[0].mxu0 %v434
        %v529 = vpop.f32.mrb[0].mxu0
        %v530 = vadd.f32 %v370, %v529
        %v531 = vpop.f32.mrb[0].mxu0
        %v532 = vadd.f32 %v370, %v531
        %v533 = vpop.f32.mrb[0].mxu0
        %v534 = vadd.f32 %v375, %v533
        %v535 = vpop.f32.mrb[0].mxu0
        %v536 = vadd.f32 %v375, %v535
        %537 = vmatprep.mubr.bf16.mxu0 0
        %538 = vmatmul.mubr.bf16.gmra.mrb[0].mxu0 %v435
        %v539 = vpop.f32.mrb[0].mxu0
        %v540 = vadd.f32 %v380, %v539
        %v541 = vpop.f32.mrb[0].mxu0
        %v542 = vadd.f32 %v380, %v541
        %v543 = vpop.f32.mrb[0].mxu0
        %v544 = vadd.f32 %v385, %v543
        %v545 = vpop.f32.mrb[0].mxu0
        %v546 = vadd.f32 %v385, %v545
        %547 = vmatprep.mubr.bf16.mxu0 0
        %548 = vmatmul.mubr.bf16.gmra.mrb[0].mxu0 %v436
        %v549 = vpop.f32.mrb[0].mxu0
        %v550 = vadd.f32 %v390, %v549
        %v551 = vpop.f32.mrb[0].mxu0
        %v552 = vadd.f32 %v390, %v551
        %v553 = vpop.f32.mrb[0].mxu0
        %v554 = vadd.f32 %v395, %v553
        %v555 = vpop.f32.mrb[0].mxu0
        %v556 = vadd.f32 %v395, %v555
        %557 = vdwg.mxu0
        %v558 = vmax.f32 %v480, 0.0
        %v559 = vmax.f32 %v482, 0.0
        %v560 = vmax.f32 %v484, 0.0
        %v561 = vmax.f32 %v486, 0.0
        %v562 = vmax.f32 %v490, 0.0
        %v563 = vmax.f32 %v492, 0.0
        %v564 = vmax.f32 %v494, 0.0
        %v565 = vmax.f32 %v496, 0.0
        %v566 = vmax.f32 %v500, 0.0
        %v567 = vmax.f32 %v502, 0.0
        %v568 = vmax.f32 %v504, 0.0
        %v569 = vmax.f32 %v506, 0.0
        %v570 = vmax.f32 %v510, 0.0
        %v571 = vmax.f32 %v512, 0.0
        %v572 = vmax.f32 %v514, 0.0
        %v573 = vmax.f32 %v516, 0.0
        %v574 = vmax.f32 %v520, 0.0
        %v575 = vmax.f32 %v522, 0.0
        %v576 = vmax.f32 %v524, 0.0
        %v577 = vmax.f32 %v526, 0.0
        %v578 = vmax.f32 %v530, 0.0
        %v579 = vmax.f32 %v532, 0.0
        %v580 = vmax.f32 %v534, 0.0
        %v581 = vmax.f32 %v536, 0.0
        %v582 = vmax.f32 %v540, 0.0
        %v583 = vmax.f32 %v542, 0.0
        %v584 = vmax.f32 %v544, 0.0
        %v585 = vmax.f32 %v546, 0.0
        %v586 = vmax.f32 %v550, 0.0
        %v587 = vmax.f32 %v552, 0.0
        %v588 = vmax.f32 %v554, 0.0
        %v589 = vmax.f32 %v556, 0.0
        %v590 = vld [vmem:[%s2] sm:$0xf]
        %v591 = vld [vmem:[%s2 + $0x4] sm:$0xf]
        %v592 = vld [vmem:[%s2 + $0x8] sm:$0xf]
        %v593 = vld [vmem:[%s2 + $0xc] sm:$0xf]
        %v594 = vld [vmem:[%s2 + $0x10] sm:$0xf]
        %v595 = vld [vmem:[%s2 + $0x14] sm:$0xf]
        %v596 = vld [vmem:[%s2 + $0x18] sm:$0xf]
        %v597 = vld [vmem:[%s2 + $0x1c] sm:$0xf]
        %v598 = vld [vmem:[%s2 + $0x20] sm:$0xf]
        %v599 = vld [vmem:[%s2 + $0x24] sm:$0xf]
        %v600 = vld [vmem:[%s2 + $0x28] sm:$0xf]
        %v601 = vld [vmem:[%s2 + $0x2c] sm:$0xf]
        %v602 = vld [vmem:[%s2 + $0x30] sm:$0xf]
        %v603 = vld [vmem:[%s2 + $0x34] sm:$0xf]
        %v604 = vld [vmem:[%s2 + $0x38] sm:$0xf]
        %v605 = vld [vmem:[%s2 + $0x3c] sm:$0xf]
        %v606 = vpack.c.bf16 %v560, %v558
        %v607 = vpack.c.bf16 %v561, %v559
        %v608 = vpack.c.bf16 %v564, %v562
        %v609 = vpack.c.bf16 %v565, %v563
        %v610 = vpack.c.bf16 %v568, %v566
        %v611 = vpack.c.bf16 %v569, %v567
        %v612 = vpack.c.bf16 %v572, %v570
        %v613 = vpack.c.bf16 %v573, %v571
        %v614 = vpack.c.bf16 %v576, %v574
        %v615 = vpack.c.bf16 %v577, %v575
        %v616 = vpack.c.bf16 %v580, %v578
        %v617 = vpack.c.bf16 %v581, %v579
        %v618 = vpack.c.bf16 %v584, %v582
        %v619 = vpack.c.bf16 %v585, %v583
        %v620 = vpack.c.bf16 %v588, %v586
        %v621 = vpack.c.bf16 %v589, %v587
        %622 = vset.pattern.permute.xlu0 1
        %623 = vperm.xlu0 %622, %v269
        %v624 = vpop.permute.xlu0 %623
        %626 = vset.pattern.permute.xlu0 1
        %627 = vperm.xlu0 %626, %v270
        %v628 = vpop.permute.xlu0 %627
        %630 = vset.pattern.permute.xlu0 1
        %631 = vperm.xlu0 %630, %v271
        %v632 = vpop.permute.xlu0 %631
        %634 = vset.pattern.permute.xlu0 1
        %635 = vperm.xlu0 %634, %v272
        %v636 = vpop.permute.xlu0 %635
        %638 = vset.pattern.permute.xlu0 1
        %639 = vperm.xlu0 %638, %v273
        %v640 = vpop.permute.xlu0 %639
        %642 = vset.pattern.permute.xlu0 1
        %643 = vperm.xlu0 %642, %v274
        %v644 = vpop.permute.xlu0 %643
        %646 = vset.pattern.permute.xlu0 1
        %647 = vperm.xlu0 %646, %v275
        %v648 = vpop.permute.xlu0 %647
        %650 = vset.pattern.permute.xlu0 1
        %651 = vperm.xlu0 %650, %v276
        %v652 = vpop.permute.xlu0 %651
        %654 = vset.pattern.permute.xlu0 1
        %655 = vperm.xlu0 %654, %v277
        %v656 = vpop.permute.xlu0 %655
        %658 = vset.pattern.permute.xlu0 1
        %659 = vperm.xlu0 %658, %v278
        %v660 = vpop.permute.xlu0 %659
        %662 = vset.pattern.permute.xlu0 1
        %663 = vperm.xlu0 %662, %v279
        %v664 = vpop.permute.xlu0 %663
        %666 = vset.pattern.permute.xlu0 1
        %667 = vperm.xlu0 %666, %v280
        %v668 = vpop.permute.xlu0 %667
        %670 = vset.pattern.permute.xlu0 1
        %671 = vperm.xlu0 %670, %v281
        %v672 = vpop.permute.xlu0 %671
        %674 = vset.pattern.permute.xlu0 1
        %675 = vperm.xlu0 %674, %v282
        %v676 = vpop.permute.xlu0 %675
        %678 = vset.pattern.permute.xlu0 1
        %679 = vperm.xlu0 %678, %v283
        %v680 = vpop.permute.xlu0 %679
        %682 = vset.pattern.permute.xlu0 1
        %683 = vperm.xlu0 %682, %v284
        %v684 = vpop.permute.xlu0 %683
        %v702 = vunpack.c.l.b16 %v590
        %v703 = vunpack.c.l.b16 %v591
        %v704 = vunpack.c.l.b16 %v592
        %v705 = vunpack.c.l.b16 %v593
        %v706 = vunpack.c.l.b16 %v594
        %v707 = vunpack.c.l.b16 %v595
        %v708 = vunpack.c.l.b16 %v596
        %v709 = vunpack.c.l.b16 %v597
        %v710 = vunpack.c.l.b16 %v598
        %v711 = vunpack.c.l.b16 %v599
        %v712 = vunpack.c.l.b16 %v600
        %v713 = vunpack.c.l.b16 %v601
        %v714 = vunpack.c.l.b16 %v602
        %v715 = vunpack.c.l.b16 %v603
        %v716 = vunpack.c.l.b16 %v604
        %v717 = vunpack.c.l.b16 %v605
        %v718 = vpack.c.b16 %v703, %v702
        %v719 = vpack.c.b16 %v705, %v704
        %v720 = vpack.c.b16 %v707, %v706
        %v721 = vpack.c.b16 %v709, %v708
        %v722 = vpack.c.b16 %v711, %v710
        %v723 = vpack.c.b16 %v713, %v712
        %v724 = vpack.c.b16 %v715, %v714
        %v725 = vpack.c.b16 %v717, %v716
        %734 = vmatprep.subr.bf16.mxu0 %v607
        %735 = vmatpush1.bf16.msra.mxu0 %v606
        %736 = vmatprep.subr.bf16.mxu0 %v609
        %737 = vmatpush1.bf16.msra.mxu0 %v608
        %738 = vmatprep.subr.bf16.mxu0 %v611
        %739 = vmatpush1.bf16.msra.mxu0 %v610
        %740 = vmatprep.subr.bf16.mxu0 %v613
        %741 = vmatpush1.bf16.msra.mxu0 %v612
        %742 = vmatprep.subr.bf16.mxu0 %v615
        %743 = vmatpush1.bf16.msra.mxu0 %v614
        %744 = vmatprep.subr.bf16.mxu0 %v617
        %745 = vmatpush1.bf16.msra.mxu0 %v616
        %746 = vmatprep.subr.bf16.mxu0 %v619
        %747 = vmatpush1.bf16.msra.mxu0 %v618
        %748 = vmatprep.subr.bf16.mxu0 %v621
        %749 = vmatpush1.bf16.msra.mxu0 %v620
        %750 = vmatprep.subr.bf16.mxu0 0
        %751 = vmatpush1.bf16.msra.mxu0 0
        %752 = vmatprep.subr.bf16.mxu0 0
        %753 = vmatpush1.bf16.msra.mxu0 0
        %754 = vmatprep.subr.bf16.mxu0 0
        %755 = vmatpush1.bf16.msra.mxu0 0
        %756 = vmatprep.subr.bf16.mxu0 0
        %757 = vmatpush1.bf16.msra.mxu0 0
        %758 = vmatprep.subr.bf16.mxu0 0
        %759 = vmatpush1.bf16.msra.mxu0 0
        %760 = vmatprep.subr.bf16.mxu0 0
        %761 = vmatpush1.bf16.msra.mxu0 0
        %762 = vmatprep.subr.bf16.mxu0 0
        %763 = vmatpush1.bf16.msra.mxu0 0
        %764 = vmatprep.subr.bf16.mxu0 0
        %765 = vmatpush1.bf16.msra.mxu0 0
        %766 = vmatprep.mubr.bf16.mxu0 0
        %767 = vmatmul.mubr.bf16.gmra.mrb[0].mxu0 %v718
        %v768 = vpop.f32.mrb[0].mxu0
        %v769 = vadd.f32 %v624, %v768
        %v770 = vpop.f32.mrb[0].mxu0
        %v771 = vadd.f32 %v624, %v770
        %v772 = vpop.f32.mrb[0].mxu0
        %v773 = vadd.f32 %v628, %v772
        %v774 = vpop.f32.mrb[0].mxu0
        %v775 = vadd.f32 %v628, %v774
        %776 = vmatprep.mubr.bf16.mxu0 0
        %777 = vmatmul.mubr.bf16.gmra.mrb[0].mxu0 %v719
        %v778 = vpop.f32.mrb[0].mxu0
        %v779 = vadd.f32 %v632, %v778
        %v780 = vpop.f32.mrb[0].mxu0
        %v781 = vadd.f32 %v632, %v780
        %v782 = vpop.f32.mrb[0].mxu0
        %v783 = vadd.f32 %v636, %v782
        %v784 = vpop.f32.mrb[0].mxu0
        %v785 = vadd.f32 %v636, %v784
        %786 = vmatprep.mubr.bf16.mxu0 0
        %787 = vmatmul.mubr.bf16.gmra.mrb[0].mxu0 %v720
        %v788 = vpop.f32.mrb[0].mxu0
        %v789 = vadd.f32 %v640, %v788
        %v790 = vpop.f32.mrb[0].mxu0
        %v791 = vadd.f32 %v640, %v790
        %v792 = vpop.f32.mrb[0].mxu0
        %v793 = vadd.f32 %v644, %v792
        %v794 = vpop.f32.mrb[0].mxu0
        %v795 = vadd.f32 %v644, %v794
        %796 = vmatprep.mubr.bf16.mxu0 0
        %797 = vmatmul.mubr.bf16.gmra.mrb[0].mxu0 %v721
        %v798 = vpop.f32.mrb[0].mxu0
        %v799 = vadd.f32 %v648, %v798
        %v800 = vpop.f32.mrb[0].mxu0
        %v801 = vadd.f32 %v648, %v800
        %v802 = vpop.f32.mrb[0].mxu0
        %v803 = vadd.f32 %v652, %v802
        %v804 = vpop.f32.mrb[0].mxu0
        %v805 = vadd.f32 %v652, %v804
        %806 = vmatprep.mubr.bf16.mxu0 0
        %807 = vmatmul.mubr.bf16.gmra.mrb[0].mxu0 %v722
        %v808 = vpop.f32.mrb[0].mxu0
        %v809 = vadd.f32 %v656, %v808
        %v810 = vpop.f32.mrb[0].mxu0
        %v811 = vadd.f32 %v656, %v810
        %v812 = vpop.f32.mrb[0].mxu0
        %v813 = vadd.f32 %v660, %v812
        %v814 = vpop.f32.mrb[0].mxu0
        %v815 = vadd.f32 %v660, %v814
        %816 = vmatprep.mubr.bf16.mxu0 0
        %817 = vmatmul.mubr.bf16.gmra.mrb[0].mxu0 %v723
        %v818 = vpop.f32.mrb[0].mxu0
        %v819 = vadd.f32 %v664, %v818
        %v820 = vpop.f32.mrb[0].mxu0
        %v821 = vadd.f32 %v664, %v820
        %v822 = vpop.f32.mrb[0].mxu0
        %v823 = vadd.f32 %v668, %v822
        %v824 = vpop.f32.mrb[0].mxu0
        %v825 = vadd.f32 %v668, %v824
        %826 = vmatprep.mubr.bf16.mxu0 0
        %827 = vmatmul.mubr.bf16.gmra.mrb[0].mxu0 %v724
        %v828 = vpop.f32.mrb[0].mxu0
        %v829 = vadd.f32 %v672, %v828
        %v830 = vpop.f32.mrb[0].mxu0
        %v831 = vadd.f32 %v672, %v830
        %v832 = vpop.f32.mrb[0].mxu0
        %v833 = vadd.f32 %v676, %v832
        %v834 = vpop.f32.mrb[0].mxu0
        %v835 = vadd.f32 %v676, %v834
        %836 = vmatprep.mubr.bf16.mxu0 0
        %837 = vmatmul.mubr.bf16.gmra.mrb[0].mxu0 %v725
        %v838 = vpop.f32.mrb[0].mxu0
        %v839 = vadd.f32 %v680, %v838
        %v840 = vpop.f32.mrb[0].mxu0
        %v841 = vadd.f32 %v680, %v840
        %v842 = vpop.f32.mrb[0].mxu0
        %v843 = vadd.f32 %v684, %v842
        %v844 = vpop.f32.mrb[0].mxu0
        %v845 = vadd.f32 %v684, %v844
        %846 = vdwg.mxu0
        %v847 = vadd.f32 %v769, %v237
        %v848 = vadd.f32 %v771, %v238
        %v849 = vadd.f32 %v773, %v239
        %v850 = vadd.f32 %v775, %v240
        %v851 = vadd.f32 %v779, %v241
        %v852 = vadd.f32 %v781, %v242
        %v853 = vadd.f32 %v783, %v243
        %v854 = vadd.f32 %v785, %v244
        %v855 = vadd.f32 %v789, %v245
        %v856 = vadd.f32 %v791, %v246
        %v857 = vadd.f32 %v793, %v247
        %v858 = vadd.f32 %v795, %v248
        %v859 = vadd.f32 %v799, %v249
        %v860 = vadd.f32 %v801, %v250
        %v861 = vadd.f32 %v803, %v251
        %v862 = vadd.f32 %v805, %v252
        %v863 = vadd.f32 %v809, %v253
        %v864 = vadd.f32 %v811, %v254
        %v865 = vadd.f32 %v813, %v255
        %v866 = vadd.f32 %v815, %v256
        %v867 = vadd.f32 %v819, %v257
        %v868 = vadd.f32 %v821, %v258
        %v869 = vadd.f32 %v823, %v259
        %v870 = vadd.f32 %v825, %v260
        %v871 = vadd.f32 %v829, %v261
        %v872 = vadd.f32 %v831, %v262
        %v873 = vadd.f32 %v833, %v263
        %v874 = vadd.f32 %v835, %v264
        %v875 = vadd.f32 %v839, %v265
        %v876 = vadd.f32 %v841, %v266
        %v877 = vadd.f32 %v843, %v267
        %v878 = vadd.f32 %v845, %v268
        %879 = vst [vmem:[%s233] sm:$0xff] %v847
        %880 = vst [vmem:[%s233 + $0x8] sm:$0xff] %v848
        %881 = vst [vmem:[%s233 + $0x10] sm:$0xff] %v849
        %882 = vst [vmem:[%s233 + $0x18] sm:$0xff] %v850
        %883 = vst [vmem:[%s233 + $0x20] sm:$0xff] %v851
        %884 = vst [vmem:[%s233 + $0x28] sm:$0xff] %v852
        %885 = vst [vmem:[%s233 + $0x30] sm:$0xff] %v853
        %886 = vst [vmem:[%s233 + $0x38] sm:$0xff] %v854
        %887 = vst [vmem:[%s233 + $0x40] sm:$0xff] %v855
        %888 = vst [vmem:[%s233 + $0x48] sm:$0xff] %v856
        %889 = vst [vmem:[%s233 + $0x50] sm:$0xff] %v857
        %890 = vst [vmem:[%s233 + $0x58] sm:$0xff] %v858
        %891 = vst [vmem:[%s233 + $0x60] sm:$0xff] %v859
        %892 = vst [vmem:[%s233 + $0x68] sm:$0xff] %v860
        %893 = vst [vmem:[%s233 + $0x70] sm:$0xff] %v861
        %894 = vst [vmem:[%s233 + $0x78] sm:$0xff] %v862
        %895 = vst [vmem:[%s233 + $0x80] sm:$0xff] %v863
        %896 = vst [vmem:[%s233 + $0x88] sm:$0xff] %v864
        %897 = vst [vmem:[%s233 + $0x90] sm:$0xff] %v865
        %898 = vst [vmem:[%s233 + $0x98] sm:$0xff] %v866
        %899 = vst [vmem:[%s233 + $0xa0] sm:$0xff] %v867
        %900 = vst [vmem:[%s233 + $0xa8] sm:$0xff] %v868
        %901 = vst [vmem:[%s233 + $0xb0] sm:$0xff] %v869
        %902 = vst [vmem:[%s233 + $0xb8] sm:$0xff] %v870
        %903 = vst [vmem:[%s233 + $0xc0] sm:$0xff] %v871
        %904 = vst [vmem:[%s233 + $0xc8] sm:$0xff] %v872
        %905 = vst [vmem:[%s233 + $0xd0] sm:$0xff] %v873
        %906 = vst [vmem:[%s233 + $0xd8] sm:$0xff] %v874
        %907 = vst [vmem:[%s233 + $0xe0] sm:$0xff] %v875
        %908 = vst [vmem:[%s233 + $0xe8] sm:$0xff] %v876
        %909 = vst [vmem:[%s233 + $0xf0] sm:$0xff] %v877
        %910 = vst [vmem:[%s233 + $0xf8] sm:$0xff] %v878
        %s911 = sand.u32 %s134, 1
        %s912 = scalar_lea.sflag [#allocation4], %s911
        %s913 = sand.u32 %s134, 1
        %s914 = smul.addr %s913, 256
        %s915 = scalar_lea.vmem [#allocation5], %s914
        // Predicated region
        $region41: #{resblock_forward.1} parent=35 // pred_check
          %p916 = pneg %p144
        $region42: #{resblock_forward.1} parent=35 // pred_check_branch
          %918 = sbr.rel (%p916) target = $region44
        $region43: #{resblock_forward.1} parent=35 // pred_region
          %s919 = smul.u32 2, %s26
          %s921 = ssub.s32 4096, 4096
          %922 = vsyncadd %s912, %s921
          %s923 = smul.addr %s25, 64
          %s924 = sadd.s32 %s919, %s923
          %s925 = smul.addr %s924, 128
          %s926 = scalar_lea.hbm %s4, %s925
          %s927 = sshll.u32 %s915, 4
          %s928 = int_to_ptr.vmem [resolvable:$true] %s927
          %933 = dma.vmem_to_hbm [thread:$0]  %s928, 4096, %s926, %s912, 256, 512, 16
        $region44: #{resblock_forward.1} parent=35 // pred_fallthru
          _
      $region36: #{resblock_forward.1} parent=5 // pred_fallthru
        _
      %p934 = scmp.le.s32.totalorder 2, %s16
      // Predicated region
      $region45: #{resblock_forward.1} parent=5 // pred_check
        %p935 = pneg %p934
      $region46: #{resblock_forward.1} parent=5 // pred_check_branch
        %937 = sbr.rel (%p935) target = $region48
      $region47: #{resblock_forward.1} parent=5 // pred_region
        %s938 = ssub.s32 %s16, 2
        // Predicated region
        $region49: #{resblock_forward.1} parent=47 // pred_check
          %p939 = pneg %p150
        $region50: #{resblock_forward.1} parent=47 // pred_check_branch
          %941 = sbr.rel (%p939) target = $region52
        $region51: #{resblock_forward.1} parent=47 // pred_region
          %s942 = sand.u32 %s135, 1
          %s943 = scalar_lea.sflag [#allocation4], %s942
          %s944 = sand.u32 %s135, 1
          %s945 = smul.addr %s944, 256
          %s946 = scalar_lea.vmem [#allocation5], %s945
          %947 = dma.done %s943, 4096
        $region52: #{resblock_forward.1} parent=47 // pred_fallthru
          _
      $region48: #{resblock_forward.1} parent=5 // pred_fallthru
        _
    $region6: #{resblock_forward.1} parent=1 // loop_footer
      %s20 = sadd.s32 1, %s16
    $region7: #{resblock_forward.1} parent=1 // loop_footer_branch
      %15 = sbr.rel target = $region3
    $region8: #{resblock_forward.1} parent=1 // loop_exit
      _
    %948 = vsyncpa [#allocation3], 1
    %s949 = scalar_lea.sflag [#allocation3], 1
    %950 = vsyncpa %s949, 1
    %951 = vsyncpa [#allocation4], 1
    %s952 = scalar_lea.sflag [#allocation4], 1
    %953 = vsyncpa %s952, 1

</llo_original>
